<compile_context>
chip_gen: v6e
topology: v6e:2x2x1
jax: 0.10.0
libtpu: 0.0.40
codegen_flags: <defaults>
</compile_context>

<pallas_src>
import jax
import jax.numpy as jnp
from jax import lax
from jax.experimental import pallas as pl
from jax.experimental.pallas import tpu as pltpu
import numpy as np


def _make_lif_kernel(tau: float, thresh: float, alpha: float,
                     s_chunk: int, unroll):
    tau = float(tau)
    thresh = float(thresh)
    alpha = float(alpha)

    def kernel(x_ref, o_ref, mem_out_ref, res_out_ref, mem_sc, res_sc):
        s = pl.program_id(1)

        # Zero the carried state at the start of each lane-tile's time sweep.
        @pl.when(s == 0)
        def _():
            mem_sc[...] = jnp.zeros_like(mem_sc)
            res_sc[...] = jnp.zeros_like(res_sc)

        def body(t, carry):
            mem, res = carry
            xt = x_ref[t]
            # mem = tau * mem + x[t]   (tau multiply specialized out when == 1)
            mem = (mem + xt) if tau == 1.0 else (tau * mem + xt)
            # ZIF forward: spike = (mem - thresh >= 0).float() * thresh
            mask = mem >= thresh
            # spike_residue = alpha * spike_residue + spike
            res = alpha * res + jnp.where(mask, thresh, 0.0).astype(jnp.float32)
            # hard reset: mem = mem * (1 - spike)  (spike is 0 or thresh)
            mem = jnp.where(mask, mem * (1.0 - thresh), mem)
            # output at this timestep is the spike residue
            o_ref[t] = res
            return mem, res

        mem, res = lax.fori_loop(
            0, s_chunk, body, (mem_sc[...], res_sc[...]), unroll=unroll)

        # Persist carry for the next S-chunk of this lane tile.
        mem_sc[...] = mem
        res_sc[...] = res

        # Final states -> outputs (written back to HBM once per lane tile).
        @pl.when(s == pl.num_programs(1) - 1)
        def _():
            mem_out_ref[...] = mem
            res_out_ref[...] = res

    return kernel


def _pick_lane_tile(D: int) -> int:
    """Largest multiple-of-128 divisor of D (<=1024), preferring >=2 blocks."""
    if D < 128 or D % 128 != 0:
        # Block equal to the full dim is always legal under the (8,128) rule.
        return D
    cands = [t for t in range(128, min(D, 1024) + 1, 128) if D % t == 0]
    multi = [t for t in cands if D // t >= 2]   # keep v7x's 2 TCs busy
    pool = multi if multi else cands
    return max(pool)


def _pick_s_chunk(S: int, B: int, td: int, budget_bytes: int) -> int:
    """Largest divisor of S whose double-buffered in+out slabs fit the budget."""
    per_s_bytes = 16 * B * td          # (2 in + 2 out buffers) * 4B per element
    cap = max(1, min(S, budget_bytes // per_s_bytes, 64))
    for c in range(cap, 0, -1):
        if S % c == 0:
            return c
    return 1


def lif_residue_forward(x, T, thresh=1.0, tau=1.0, gama=1.0, alpha=0.5,
                        vmem_budget_bytes=20 * 1024 * 1024):
    """x: (steps, T*B, D) float32.  Returns (y, final_mem, final_residue)."""
    del gama  # only affects ZIF backward (surrogate gradient); forward ignores it
    steps, TB, D = x.shape
    assert TB % T == 0
    B = TB // T
    S = steps * T

    # ExpandTemporalDim + step-loop flattening: (steps, T*B, D) -> (S, B, D)
    xk = x.reshape(steps, T, B, D).reshape(S, B, D).astype(jnp.float32)

    td = _pick_lane_tile(D)
    assert D % td == 0
    s_chunk = _pick_s_chunk(S, B, td, vmem_budget_bytes)
    n_d = D // td
    n_s = S // s_chunk
    unroll = True if s_chunk <= 16 else 4

    kernel = _make_lif_kernel(tau, thresh, alpha, s_chunk, unroll)

    out, mem, res = pl.pallas_call(
        kernel,
        out_shape=(
            jax.ShapeDtypeStruct((S, B, D), jnp.float32),
            jax.ShapeDtypeStruct((B, D), jnp.float32),
            jax.ShapeDtypeStruct((B, D), jnp.float32),
        ),
        grid_spec=pltpu.PrefetchScalarGridSpec(
            num_scalar_prefetch=0,
            grid=(n_d, n_s),                      # (parallel lanes, time chunks)
            in_specs=[
                pl.BlockSpec((s_chunk, B, td), lambda j, s: (s, 0, j)),
            ],
            out_specs=(
                pl.BlockSpec((s_chunk, B, td), lambda j, s: (s, 0, j)),
                pl.BlockSpec((B, td), lambda j, s: (0, j)),   # final mem
                pl.BlockSpec((B, td), lambda j, s: (0, j)),   # final residue
            ),
            scratch_shapes=[
                pltpu.VMEM((B, td), jnp.float32),   # mem carry
                pltpu.VMEM((B, td), jnp.float32),   # residue carry
            ],
        ),
        compiler_params=pltpu.CompilerParams(
            dimension_semantics=("parallel", "arbitrary"),
            vmem_limit_bytes=32 * 1024 * 1024,
        ),
    )(xk)

    # MergeTemporalDim + stack over steps: (S, B, D) -> (steps, T*B, D)
    y = out.reshape(steps, T, B, D).reshape(steps, T * B, D)
    return y, mem, res


def lif_residue_reference(x, T, thresh=1.0, tau=1.0, alpha=0.5):
    """Pure-JAX port of the PyTorch forward (3-D branch), for verification."""
    steps, TB, D = x.shape
    B = TB // T
    mem = jnp.zeros((B, D), jnp.float32)
    res = jnp.zeros((B, D), jnp.float32)
    episode = []
    for step in range(steps):
        xs = x[step].reshape(T, B, D)
        spike_pot = []
        for t in range(T):
            mem = tau * mem + xs[t]
            spike = (mem - thresh >= 0.0).astype(jnp.float32) * thresh
            res = alpha * res + spike
            mem = mem * (1.0 - spike)
            spike_pot.append(res)
        episode.append(jnp.stack(spike_pot, axis=0).reshape(T * B, D))
    return jnp.stack(episode, axis=0), mem, res


def _check(x, T, **kw):
    y, mem, res = lif_residue_forward(x, T=T, **kw)
    y = jax.block_until_ready(y)
    mem = jax.block_until_ready(mem)
    res = jax.block_until_ready(res)
    y_r, mem_r, res_r = lif_residue_reference(
        x, T=T, thresh=kw.get("thresh", 1.0), tau=kw.get("tau", 1.0),
        alpha=kw.get("alpha", 0.5))
    np.testing.assert_allclose(np.asarray(y), np.asarray(y_r), rtol=1e-6, atol=1e-6)
    np.testing.assert_allclose(np.asarray(mem), np.asarray(mem_r), rtol=1e-6, atol=1e-6)
    np.testing.assert_allclose(np.asarray(res), np.asarray(res_r), rtol=1e-6, atol=1e-6)


if __name__ == "__main__":
    key = jax.random.PRNGKey(0)

    # Case 1: small shapes; whole time axis fits one chunk, D split into 2
    # parallel lane tiles.  x: (steps, T*B, D) = (2, 32, 256).
    steps, T, B, D = 2, 4, 8, 256
    x1 = jax.random.normal(key, (steps, T * B, D), dtype=jnp.float32) * 1.5
    _check(x1, T=T, thresh=1.0, tau=1.0, gama=1.0, alpha=0.5)

    # Case 2: tiny VMEM budget forces S-chunking (carry across grid steps) and
    # non-unit tau to exercise the general path.  x: (3, 64, 512), S=24,
    # s_chunk < S.
    steps, T, B, D = 3, 8, 8, 512
    x2 = jax.random.normal(jax.random.PRNGKey(1), (steps, T * B, D),
                           dtype=jnp.float32) * 1.5
    _check(x2, T=T, thresh=0.75, tau=0.9, gama=1.0, alpha=0.5,
           vmem_budget_bytes=64 * 1024)

    print("KERNEL_OK")
</pallas_src>

<mosaic_0001>
module attributes {stable_mosaic.version = 11 : i64} {
  func.func @kernel(%arg0: i32, %arg1: i32, %arg2: memref<8x8x128xf32, #tpu.memory_space<vmem>>, %arg3: memref<8x8x128xf32, #tpu.memory_space<vmem>>, %arg4: memref<8x128xf32, #tpu.memory_space<vmem>>, %arg5: memref<8x128xf32, #tpu.memory_space<vmem>>, %arg6: memref<8x128xf32, #tpu.memory_space<vmem>>, %arg7: memref<8x128xf32, #tpu.memory_space<vmem>>) attributes {dimension_semantics = [#tpu.dimension_semantics<parallel>, #tpu.dimension_semantics<arbitrary>], iteration_bounds = array<i64: 2, 1>, scalar_prefetch = 0 : i64, scratch_operands = 2 : i64, tpu.core_type = #tpu.core_type<tc>, window_params = [{transform_indices = @transform_0, window_bounds = array<i64: 8, 8, 128>}, {transform_indices = @transform_1, window_bounds = array<i64: 8, 8, 128>}, {transform_indices = @transform_2, window_bounds = array<i64: 8, 128>}, {transform_indices = @transform_3, window_bounds = array<i64: 8, 128>}]} {
    %c0_i32 = arith.constant 0 : i32
    %0 = arith.cmpi eq, %arg1, %c0_i32 : i32
    %1 = arith.extui %0 : i1 to i32
    %c0_i32_0 = arith.constant 0 : i32
    %2 = arith.cmpi ne, %1, %c0_i32_0 : i32
    scf.if %2 {
      %cst_82 = arith.constant 0.000000e+00 : f32
      %162 = vector.broadcast %cst_82 : f32 to vector<8x128xf32>
      %c0_83 = arith.constant 0 : index
      %c0_84 = arith.constant 0 : index
      %163 = vector.load %arg6[%c0_83, %c0_84] : memref<8x128xf32, #tpu.memory_space<vmem>>, vector<8x128xf32>
      tpu.vector_store %arg6[%c0_83, %c0_84], %162 {strides = array<i32>} : memref<8x128xf32, #tpu.memory_space<vmem>>, vector<8x128xf32>,
      %cst_85 = arith.constant 0.000000e+00 : f32
      %164 = vector.broadcast %cst_85 : f32 to vector<8x128xf32>
      %c0_86 = arith.constant 0 : index
      %c0_87 = arith.constant 0 : index
      %165 = vector.load %arg7[%c0_86, %c0_87] : memref<8x128xf32, #tpu.memory_space<vmem>>, vector<8x128xf32>
      tpu.vector_store %arg7[%c0_86, %c0_87], %164 {strides = array<i32>} : memref<8x128xf32, #tpu.memory_space<vmem>>, vector<8x128xf32>,
    } else {
    }
    %c0 = arith.constant 0 : index
    %c0_1 = arith.constant 0 : index
    %3 = vector.load %arg6[%c0, %c0_1] : memref<8x128xf32, #tpu.memory_space<vmem>>, vector<8x128xf32>
    %c0_2 = arith.constant 0 : index
    %c0_3 = arith.constant 0 : index
    %4 = vector.load %arg7[%c0_2, %c0_3] : memref<8x128xf32, #tpu.memory_space<vmem>>, vector<8x128xf32>
    %c0_i32_4 = arith.constant 0 : i32
    %5 = arith.index_cast %c0_i32_4 : i32 to index
    %c0_5 = arith.constant 0 : index
    %c0_6 = arith.constant 0 : index
    %6 = vector.load %arg2[%5, %c0_5, %c0_6] : memref<8x8x128xf32, #tpu.memory_space<vmem>>, vector<1x8x128xf32>
    %7 = vector.shape_cast %6 : vector<1x8x128xf32> to vector<8x128xf32>
    %8 = arith.addf %3, %7 : vector<8x128xf32>
    %cst = arith.constant 1.000000e+00 : f32
    %9 = vector.broadcast %cst : f32 to vector<8x128xf32>
    %10 = arith.cmpf oge, %8, %9 : vector<8x128xf32>
    %cst_7 = arith.constant 5.000000e-01 : f32
    %11 = vector.broadcast %cst_7 : f32 to vector<8x128xf32>
    %12 = arith.mulf %11, %4 : vector<8x128xf32>
    %cst_8 = arith.constant 1.000000e+00 : f32
    %cst_9 = arith.constant 0.000000e+00 : f32
    %13 = vector.broadcast %cst_8 : f32 to vector<8x128xf32>
    %14 = vector.broadcast %cst_9 : f32 to vector<8x128xf32>
    %15 = arith.select %10, %13, %14 : vector<8x128xi1>, vector<8x128xf32>
    %16 = arith.addf %12, %15 : vector<8x128xf32>
    %cst_10 = arith.constant 0.000000e+00 : f32
    %17 = vector.broadcast %cst_10 : f32 to vector<8x128xf32>
    %18 = arith.mulf %8, %17 : vector<8x128xf32>
    %19 = arith.select %10, %18, %8 : vector<8x128xi1>, vector<8x128xf32>
    %20 = arith.index_cast %c0_i32_4 : i32 to index
    %c0_11 = arith.constant 0 : index
    %c0_12 = arith.constant 0 : index
    %21 = vector.load %arg3[%20, %c0_11, %c0_12] : memref<8x8x128xf32, #tpu.memory_space<vmem>>, vector<1x8x128xf32>
    %22 = vector.shape_cast %21 : vector<1x8x128xf32> to vector<8x128xf32>
    %23 = vector.shape_cast %16 : vector<8x128xf32> to vector<1x8x128xf32>
    tpu.vector_store %arg3[%20, %c0_11, %c0_12], %23 {strides = array<i32>} : memref<8x8x128xf32, #tpu.memory_space<vmem>>, vector<1x8x128xf32>,
    %c1_i32 = arith.constant 1 : i32
    %24 = arith.index_cast %c1_i32 : i32 to index
    %c0_13 = arith.constant 0 : index
    %c0_14 = arith.constant 0 : index
    %25 = vector.load %arg2[%24, %c0_13, %c0_14] : memref<8x8x128xf32, #tpu.memory_space<vmem>>, vector<1x8x128xf32>
    %26 = vector.shape_cast %25 : vector<1x8x128xf32> to vector<8x128xf32>
    %27 = arith.addf %19, %26 : vector<8x128xf32>
    %cst_15 = arith.constant 1.000000e+00 : f32
    %28 = vector.broadcast %cst_15 : f32 to vector<8x128xf32>
    %29 = arith.cmpf oge, %27, %28 : vector<8x128xf32>
    %cst_16 = arith.constant 5.000000e-01 : f32
    %30 = vector.broadcast %cst_16 : f32 to vector<8x128xf32>
    %31 = arith.mulf %30, %16 : vector<8x128xf32>
    %cst_17 = arith.constant 1.000000e+00 : f32
    %cst_18 = arith.constant 0.000000e+00 : f32
    %32 = vector.broadcast %cst_17 : f32 to vector<8x128xf32>
    %33 = vector.broadcast %cst_18 : f32 to vector<8x128xf32>
    %34 = arith.select %29, %32, %33 : vector<8x128xi1>, vector<8x128xf32>
    %35 = arith.addf %31, %34 : vector<8x128xf32>
    %cst_19 = arith.constant 0.000000e+00 : f32
    %36 = vector.broadcast %cst_19 : f32 to vector<8x128xf32>
    %37 = arith.mulf %27, %36 : vector<8x128xf32>
    %38 = arith.select %29, %37, %27 : vector<8x128xi1>, vector<8x128xf32>
    %39 = arith.index_cast %c1_i32 : i32 to index
    %c0_20 = arith.constant 0 : index
    %c0_21 = arith.constant 0 : index
    %40 = vector.load %arg3[%39, %c0_20, %c0_21] : memref<8x8x128xf32, #tpu.memory_space<vmem>>, vector<1x8x128xf32>
    %41 = vector.shape_cast %40 : vector<1x8x128xf32> to vector<8x128xf32>
    %42 = vector.shape_cast %35 : vector<8x128xf32> to vector<1x8x128xf32>
    tpu.vector_store %arg3[%39, %c0_20, %c0_21], %42 {strides = array<i32>} : memref<8x8x128xf32, #tpu.memory_space<vmem>>, vector<1x8x128xf32>,
    %c2_i32 = arith.constant 2 : i32
    %43 = arith.index_cast %c2_i32 : i32 to index
    %c0_22 = arith.constant 0 : index
    %c0_23 = arith.constant 0 : index
    %44 = vector.load %arg2[%43, %c0_22, %c0_23] : memref<8x8x128xf32, #tpu.memory_space<vmem>>, vector<1x8x128xf32>
    %45 = vector.shape_cast %44 : vector<1x8x128xf32> to vector<8x128xf32>
    %46 = arith.addf %38, %45 : vector<8x128xf32>
    %cst_24 = arith.constant 1.000000e+00 : f32
    %47 = vector.broadcast %cst_24 : f32 to vector<8x128xf32>
    %48 = arith.cmpf oge, %46, %47 : vector<8x128xf32>
    %cst_25 = arith.constant 5.000000e-01 : f32
    %49 = vector.broadcast %cst_25 : f32 to vector<8x128xf32>
    %50 = arith.mulf %49, %35 : vector<8x128xf32>
    %cst_26 = arith.constant 1.000000e+00 : f32
    %cst_27 = arith.constant 0.000000e+00 : f32
    %51 = vector.broadcast %cst_26 : f32 to vector<8x128xf32>
    %52 = vector.broadcast %cst_27 : f32 to vector<8x128xf32>
    %53 = arith.select %48, %51, %52 : vector<8x128xi1>, vector<8x128xf32>
    %54 = arith.addf %50, %53 : vector<8x128xf32>
    %cst_28 = arith.constant 0.000000e+00 : f32
    %55 = vector.broadcast %cst_28 : f32 to vector<8x128xf32>
    %56 = arith.mulf %46, %55 : vector<8x128xf32>
    %57 = arith.select %48, %56, %46 : vector<8x128xi1>, vector<8x128xf32>
    %58 = arith.index_cast %c2_i32 : i32 to index
    %c0_29 = arith.constant 0 : index
    %c0_30 = arith.constant 0 : index
    %59 = vector.load %arg3[%58, %c0_29, %c0_30] : memref<8x8x128xf32, #tpu.memory_space<vmem>>, vector<1x8x128xf32>
    %60 = vector.shape_cast %59 : vector<1x8x128xf32> to vector<8x128xf32>
    %61 = vector.shape_cast %54 : vector<8x128xf32> to vector<1x8x128xf32>
    tpu.vector_store %arg3[%58, %c0_29, %c0_30], %61 {strides = array<i32>} : memref<8x8x128xf32, #tpu.memory_space<vmem>>, vector<1x8x128xf32>,
    %c3_i32 = arith.constant 3 : i32
    %62 = arith.index_cast %c3_i32 : i32 to index
    %c0_31 = arith.constant 0 : index
    %c0_32 = arith.constant 0 : index
    %63 = vector.load %arg2[%62, %c0_31, %c0_32] : memref<8x8x128xf32, #tpu.memory_space<vmem>>, vector<1x8x128xf32>
    %64 = vector.shape_cast %63 : vector<1x8x128xf32> to vector<8x128xf32>
    %65 = arith.addf %57, %64 : vector<8x128xf32>
    %cst_33 = arith.constant 1.000000e+00 : f32
    %66 = vector.broadcast %cst_33 : f32 to vector<8x128xf32>
    %67 = arith.cmpf oge, %65, %66 : vector<8x128xf32>
    %cst_34 = arith.constant 5.000000e-01 : f32
    %68 = vector.broadcast %cst_34 : f32 to vector<8x128xf32>
    %69 = arith.mulf %68, %54 : vector<8x128xf32>
    %cst_35 = arith.constant 1.000000e+00 : f32
    %cst_36 = arith.constant 0.000000e+00 : f32
    %70 = vector.broadcast %cst_35 : f32 to vector<8x128xf32>
    %71 = vector.broadcast %cst_36 : f32 to vector<8x128xf32>
    %72 = arith.select %67, %70, %71 : vector<8x128xi1>, vector<8x128xf32>
    %73 = arith.addf %69, %72 : vector<8x128xf32>
    %cst_37 = arith.constant 0.000000e+00 : f32
    %74 = vector.broadcast %cst_37 : f32 to vector<8x128xf32>
    %75 = arith.mulf %65, %74 : vector<8x128xf32>
    %76 = arith.select %67, %75, %65 : vector<8x128xi1>, vector<8x128xf32>
    %77 = arith.index_cast %c3_i32 : i32 to index
    %c0_38 = arith.constant 0 : index
    %c0_39 = arith.constant 0 : index
    %78 = vector.load %arg3[%77, %c0_38, %c0_39] : memref<8x8x128xf32, #tpu.memory_space<vmem>>, vector<1x8x128xf32>
    %79 = vector.shape_cast %78 : vector<1x8x128xf32> to vector<8x128xf32>
    %80 = vector.shape_cast %73 : vector<8x128xf32> to vector<1x8x128xf32>
    tpu.vector_store %arg3[%77, %c0_38, %c0_39], %80 {strides = array<i32>} : memref<8x8x128xf32, #tpu.memory_space<vmem>>, vector<1x8x128xf32>,
    %c4_i32 = arith.constant 4 : i32
    %81 = arith.index_cast %c4_i32 : i32 to index
    %c0_40 = arith.constant 0 : index
    %c0_41 = arith.constant 0 : index
    %82 = vector.load %arg2[%81, %c0_40, %c0_41] : memref<8x8x128xf32, #tpu.memory_space<vmem>>, vector<1x8x128xf32>
    %83 = vector.shape_cast %82 : vector<1x8x128xf32> to vector<8x128xf32>
    %84 = arith.addf %76, %83 : vector<8x128xf32>
    %cst_42 = arith.constant 1.000000e+00 : f32
    %85 = vector.broadcast %cst_42 : f32 to vector<8x128xf32>
    %86 = arith.cmpf oge, %84, %85 : vector<8x128xf32>
    %cst_43 = arith.constant 5.000000e-01 : f32
    %87 = vector.broadcast %cst_43 : f32 to vector<8x128xf32>
    %88 = arith.mulf %87, %73 : vector<8x128xf32>
    %cst_44 = arith.constant 1.000000e+00 : f32
    %cst_45 = arith.constant 0.000000e+00 : f32
    %89 = vector.broadcast %cst_44 : f32 to vector<8x128xf32>
    %90 = vector.broadcast %cst_45 : f32 to vector<8x128xf32>
    %91 = arith.select %86, %89, %90 : vector<8x128xi1>, vector<8x128xf32>
    %92 = arith.addf %88, %91 : vector<8x128xf32>
    %cst_46 = arith.constant 0.000000e+00 : f32
    %93 = vector.broadcast %cst_46 : f32 to vector<8x128xf32>
    %94 = arith.mulf %84, %93 : vector<8x128xf32>
    %95 = arith.select %86, %94, %84 : vector<8x128xi1>, vector<8x128xf32>
    %96 = arith.index_cast %c4_i32 : i32 to index
    %c0_47 = arith.constant 0 : index
    %c0_48 = arith.constant 0 : index
    %97 = vector.load %arg3[%96, %c0_47, %c0_48] : memref<8x8x128xf32, #tpu.memory_space<vmem>>, vector<1x8x128xf32>
    %98 = vector.shape_cast %97 : vector<1x8x128xf32> to vector<8x128xf32>
    %99 = vector.shape_cast %92 : vector<8x128xf32> to vector<1x8x128xf32>
    tpu.vector_store %arg3[%96, %c0_47, %c0_48], %99 {strides = array<i32>} : memref<8x8x128xf32, #tpu.memory_space<vmem>>, vector<1x8x128xf32>,
    %c5_i32 = arith.constant 5 : i32
    %100 = arith.index_cast %c5_i32 : i32 to index
    %c0_49 = arith.constant 0 : index
    %c0_50 = arith.constant 0 : index
    %101 = vector.load %arg2[%100, %c0_49, %c0_50] : memref<8x8x128xf32, #tpu.memory_space<vmem>>, vector<1x8x128xf32>
    %102 = vector.shape_cast %101 : vector<1x8x128xf32> to vector<8x128xf32>
    %103 = arith.addf %95, %102 : vector<8x128xf32>
    %cst_51 = arith.constant 1.000000e+00 : f32
    %104 = vector.broadcast %cst_51 : f32 to vector<8x128xf32>
    %105 = arith.cmpf oge, %103, %104 : vector<8x128xf32>
    %cst_52 = arith.constant 5.000000e-01 : f32
    %106 = vector.broadcast %cst_52 : f32 to vector<8x128xf32>
    %107 = arith.mulf %106, %92 : vector<8x128xf32>
    %cst_53 = arith.constant 1.000000e+00 : f32
    %cst_54 = arith.constant 0.000000e+00 : f32
    %108 = vector.broadcast %cst_53 : f32 to vector<8x128xf32>
    %109 = vector.broadcast %cst_54 : f32 to vector<8x128xf32>
    %110 = arith.select %105, %108, %109 : vector<8x128xi1>, vector<8x128xf32>
    %111 = arith.addf %107, %110 : vector<8x128xf32>
    %cst_55 = arith.constant 0.000000e+00 : f32
    %112 = vector.broadcast %cst_55 : f32 to vector<8x128xf32>
    %113 = arith.mulf %103, %112 : vector<8x128xf32>
    %114 = arith.select %105, %113, %103 : vector<8x128xi1>, vector<8x128xf32>
    %115 = arith.index_cast %c5_i32 : i32 to index
    %c0_56 = arith.constant 0 : index
    %c0_57 = arith.constant 0 : index
    %116 = vector.load %arg3[%115, %c0_56, %c0_57] : memref<8x8x128xf32, #tpu.memory_space<vmem>>, vector<1x8x128xf32>
    %117 = vector.shape_cast %116 : vector<1x8x128xf32> to vector<8x128xf32>
    %118 = vector.shape_cast %111 : vector<8x128xf32> to vector<1x8x128xf32>
    tpu.vector_store %arg3[%115, %c0_56, %c0_57], %118 {strides = array<i32>} : memref<8x8x128xf32, #tpu.memory_space<vmem>>, vector<1x8x128xf32>,
    %c6_i32 = arith.constant 6 : i32
    %119 = arith.index_cast %c6_i32 : i32 to index
    %c0_58 = arith.constant 0 : index
    %c0_59 = arith.constant 0 : index
    %120 = vector.load %arg2[%119, %c0_58, %c0_59] : memref<8x8x128xf32, #tpu.memory_space<vmem>>, vector<1x8x128xf32>
    %121 = vector.shape_cast %120 : vector<1x8x128xf32> to vector<8x128xf32>
    %122 = arith.addf %114, %121 : vector<8x128xf32>
    %cst_60 = arith.constant 1.000000e+00 : f32
    %123 = vector.broadcast %cst_60 : f32 to vector<8x128xf32>
    %124 = arith.cmpf oge, %122, %123 : vector<8x128xf32>
    %cst_61 = arith.constant 5.000000e-01 : f32
    %125 = vector.broadcast %cst_61 : f32 to vector<8x128xf32>
    %126 = arith.mulf %125, %111 : vector<8x128xf32>
    %cst_62 = arith.constant 1.000000e+00 : f32
    %cst_63 = arith.constant 0.000000e+00 : f32
    %127 = vector.broadcast %cst_62 : f32 to vector<8x128xf32>
    %128 = vector.broadcast %cst_63 : f32 to vector<8x128xf32>
    %129 = arith.select %124, %127, %128 : vector<8x128xi1>, vector<8x128xf32>
    %130 = arith.addf %126, %129 : vector<8x128xf32>
    %cst_64 = arith.constant 0.000000e+00 : f32
    %131 = vector.broadcast %cst_64 : f32 to vector<8x128xf32>
    %132 = arith.mulf %122, %131 : vector<8x128xf32>
    %133 = arith.select %124, %132, %122 : vector<8x128xi1>, vector<8x128xf32>
    %134 = arith.index_cast %c6_i32 : i32 to index
    %c0_65 = arith.constant 0 : index
    %c0_66 = arith.constant 0 : index
    %135 = vector.load %arg3[%134, %c0_65, %c0_66] : memref<8x8x128xf32, #tpu.memory_space<vmem>>, vector<1x8x128xf32>
    %136 = vector.shape_cast %135 : vector<1x8x128xf32> to vector<8x128xf32>
    %137 = vector.shape_cast %130 : vector<8x128xf32> to vector<1x8x128xf32>
    tpu.vector_store %arg3[%134, %c0_65, %c0_66], %137 {strides = array<i32>} : memref<8x8x128xf32, #tpu.memory_space<vmem>>, vector<1x8x128xf32>,
    %c7_i32 = arith.constant 7 : i32
    %138 = arith.index_cast %c7_i32 : i32 to index
    %c0_67 = arith.constant 0 : index
    %c0_68 = arith.constant 0 : index
    %139 = vector.load %arg2[%138, %c0_67, %c0_68] : memref<8x8x128xf32, #tpu.memory_space<vmem>>, vector<1x8x128xf32>
    %140 = vector.shape_cast %139 : vector<1x8x128xf32> to vector<8x128xf32>
    %141 = arith.addf %133, %140 : vector<8x128xf32>
    %cst_69 = arith.constant 1.000000e+00 : f32
    %142 = vector.broadcast %cst_69 : f32 to vector<8x128xf32>
    %143 = arith.cmpf oge, %141, %142 : vector<8x128xf32>
    %cst_70 = arith.constant 5.000000e-01 : f32
    %144 = vector.broadcast %cst_70 : f32 to vector<8x128xf32>
    %145 = arith.mulf %144, %130 : vector<8x128xf32>
    %cst_71 = arith.constant 1.000000e+00 : f32
    %cst_72 = arith.constant 0.000000e+00 : f32
    %146 = vector.broadcast %cst_71 : f32 to vector<8x128xf32>
    %147 = vector.broadcast %cst_72 : f32 to vector<8x128xf32>
    %148 = arith.select %143, %146, %147 : vector<8x128xi1>, vector<8x128xf32>
    %149 = arith.addf %145, %148 : vector<8x128xf32>
    %cst_73 = arith.constant 0.000000e+00 : f32
    %150 = vector.broadcast %cst_73 : f32 to vector<8x128xf32>
    %151 = arith.mulf %141, %150 : vector<8x128xf32>
    %152 = arith.select %143, %151, %141 : vector<8x128xi1>, vector<8x128xf32>
    %153 = arith.index_cast %c7_i32 : i32 to index
    %c0_74 = arith.constant 0 : index
    %c0_75 = arith.constant 0 : index
    %154 = vector.load %arg3[%153, %c0_74, %c0_75] : memref<8x8x128xf32, #tpu.memory_space<vmem>>, vector<1x8x128xf32>
    %155 = vector.shape_cast %154 : vector<1x8x128xf32> to vector<8x128xf32>
    %156 = vector.shape_cast %149 : vector<8x128xf32> to vector<1x8x128xf32>
    tpu.vector_store %arg3[%153, %c0_74, %c0_75], %156 {strides = array<i32>} : memref<8x8x128xf32, #tpu.memory_space<vmem>>, vector<1x8x128xf32>,
    %c8_i32 = arith.constant 8 : i32
    %c0_76 = arith.constant 0 : index
    %c0_77 = arith.constant 0 : index
    %157 = vector.load %arg6[%c0_76, %c0_77] : memref<8x128xf32, #tpu.memory_space<vmem>>, vector<8x128xf32>
    tpu.vector_store %arg6[%c0_76, %c0_77], %152 {strides = array<i32>} : memref<8x128xf32, #tpu.memory_space<vmem>>, vector<8x128xf32>,
    %c0_78 = arith.constant 0 : index
    %c0_79 = arith.constant 0 : index
    %158 = vector.load %arg7[%c0_78, %c0_79] : memref<8x128xf32, #tpu.memory_space<vmem>>, vector<8x128xf32>
    tpu.vector_store %arg7[%c0_78, %c0_79], %149 {strides = array<i32>} : memref<8x128xf32, #tpu.memory_space<vmem>>, vector<8x128xf32>,
    %c0_i32_80 = arith.constant 0 : i32
    %159 = arith.cmpi eq, %arg1, %c0_i32_80 : i32
    %160 = arith.extui %159 : i1 to i32
    %c0_i32_81 = arith.constant 0 : i32
    %161 = arith.cmpi ne, %160, %c0_i32_81 : i32
    scf.if %161 {
      %c0_82 = arith.constant 0 : index
      %c0_83 = arith.constant 0 : index
      %162 = vector.load %arg4[%c0_82, %c0_83] : memref<8x128xf32, #tpu.memory_space<vmem>>, vector<8x128xf32>
      tpu.vector_store %arg4[%c0_82, %c0_83], %152 {strides = array<i32>} : memref<8x128xf32, #tpu.memory_space<vmem>>, vector<8x128xf32>,
      %c0_84 = arith.constant 0 : index
      %c0_85 = arith.constant 0 : index
      %163 = vector.load %arg5[%c0_84, %c0_85] : memref<8x128xf32, #tpu.memory_space<vmem>>, vector<8x128xf32>
      tpu.vector_store %arg5[%c0_84, %c0_85], %149 {strides = array<i32>} : memref<8x128xf32, #tpu.memory_space<vmem>>, vector<8x128xf32>,
    } else {
    }
    return
  }
  func.func @transform_0(%arg0: i32, %arg1: i32) -> (i32, i32, i32) {
    %c0_i32 = arith.constant 0 : i32
    %c0_i32_0 = arith.constant 0 : i32
    return %arg1, %c0_i32, %arg0 : i32, i32, i32
  }
  func.func @transform_1(%arg0: i32, %arg1: i32) -> (i32, i32, i32) {
    %c0_i32 = arith.constant 0 : i32
    %c0_i32_0 = arith.constant 0 : i32
    return %arg1, %c0_i32, %arg0 : i32, i32, i32
  }
  func.func @transform_2(%arg0: i32, %arg1: i32) -> (i32, i32) {
    %c0_i32 = arith.constant 0 : i32
    %c0_i32_0 = arith.constant 0 : i32
    return %c0_i32, %arg0 : i32, i32
  }
  func.func @transform_3(%arg0: i32, %arg1: i32) -> (i32, i32) {
    %c0_i32 = arith.constant 0 : i32
    %c0_i32_0 = arith.constant 0 : i32
    return %c0_i32, %arg0 : i32, i32
  }
}

</mosaic_0001>

<llo_original>
// kernel: tpu_custom_call.1
$region0: #{tpu_custom_call.1}
  #allocation0 [shape = 'u32[]', space=smem, size = 0x4, offset = 0x4, fixed_abs, tag = 'smem constant byte address 0x4 - core index']
  #allocation1 [shape = 'u32[144,128]{1,0:T(1,128)}', space=vmem, size = 0x12000, scoped, tag = 'internal scratch']
  #allocation2 [shape = 'f32[8,128]{1,0:T(8,128)}', space=vmem, size = 0x1000, scoped, tag = 'scratch operand']
  #allocation3 [shape = 'f32[8,128]{1,0:T(8,128)}', space=vmem, size = 0x1000, scoped, tag = 'scratch operand']
  %s0 = inlined_call_operand.hbm [shape: f32[8,8,256], index: 0, kind: input, shape index: {}]
  %s1 = inlined_call_operand.hbm [shape: f32[8,8,256], index: 1, kind: output, shape index: {0}]
  %s2 = inlined_call_operand.hbm [shape: f32[8,256], index: 2, kind: output, shape index: {1}]
  %s3 = inlined_call_operand.hbm [shape: f32[8,256], index: 3, kind: output, shape index: {2}]
  %4 = xla_tuple %s1, %s2, %s3
  %s5 = sld [smem:[#allocation0]]
  $region65: #{tpu_custom_call.1} parent=0
    _
  %s7 = ssub.s32 1, %s5
  %s8 = scalar_select 0, %s7, %s5
  $region1: #{tpu_custom_call.1} parent=0
    #allocation4 [shape = 'u8[65536]{0}', space=vmem, size = 0x10000, scoped, tag = 'input window, operand 0']
    #allocation5 [shape = 's32[2]{0}', space=sflag, size = 0x8, scoped, tag = 'scoped memory for tpu_custom_call.1']
    #allocation6 [shape = 's32[2]{0}', space=sflag, size = 0x8, scoped, tag = 'scoped memory for tpu_custom_call.1']
    #allocation7 [shape = 'u8[65536]{0}', space=vmem, size = 0x10000, scoped, tag = 'output window, operand 0']
    #allocation8 [shape = 'u8[8192]{0}', space=vmem, size = 0x2000, scoped, tag = 'output window, operand 1']
    #allocation9 [shape = 's32[2]{0}', space=sflag, size = 0x8, scoped, tag = 'scoped memory for tpu_custom_call.1']
    #allocation10 [shape = 'u8[8192]{0}', space=vmem, size = 0x2000, scoped, tag = 'output window, operand 2']
    %9 = vsyncpa [#allocation5], 0
    %s10 = scalar_lea.sflag [#allocation5], 1
    %11 = vsyncpa %s10, 0
    %12 = vsyncpa [#allocation6], 0
    %s13 = scalar_lea.sflag [#allocation6], 1
    %14 = vsyncpa %s13, 0
    %15 = vsyncpa [#allocation9], 0
    %s16 = scalar_lea.sflag [#allocation9], 1
    %17 = vsyncpa %s16, 0
    loop: start=0, step=1, limit=4
    $region2: #{tpu_custom_call.1} parent=1 // loop_pre_header
      _
    $region3: #{tpu_custom_call.1} parent=1 // loop_header
      %s19 = sphi 0, %s23
      %p20 = scmp.ge.s32.totalorder %s19, 4
      %s26 = sphi 0, %s38
      %s27 = sphi 0, %s34
      %s28 = sphi 0, %s26
      %s29 = sphi 0, %s27
      %s30 = sphi 0, %s28
      %s31 = sphi 0, %s29
      %s43 = sphi 0, %s45
      %s46 = sphi 0, %s43
      %s47 = sphi 0, %s46
      %s63 = sphi 0, %s47
      %s71 = sphi 0, %s73
      %s74 = sphi 0, %s71
      %s75 = sphi 0, %s74
      %s91 = sphi 0, %s75
      %s97 = sphi 0, %s99
      %s100 = sphi 0, %s97
      %s101 = sphi 0, %s100
      %s117 = sphi 0, %s101
      %s123 = sphi 0, %s125
      %s126 = sphi 0, %s123
      %s127 = sphi 0, %s126
      %s143 = sphi 0, %s127
    $region4: #{tpu_custom_call.1} parent=1 // loop_header_branch
      %22 = sbr.rel (%p20) target = $region8
    $region5: #{tpu_custom_call.1} parent=1 // loop_body
      %s24 = ssub.s32 %s19, 1
      %s25 = ssub.s32 %s19, 2
      %s32 = sadd.s32 1, %s27
      %p33 = scmp.ge.s32.totalorder %s32, 1
      %s34 = scalar_select %p33, 0, %s32
      %s35 = sadd.s32 1, %s26
      %s36 = scalar_select %p33, %s35, %s26
      %p37 = scmp.ge.s32.totalorder %s36, 2
      %s38 = scalar_select %p37, 0, %s36
      %s39 = ssub.s32 %s27, %s34
      %s40 = ssub.s32 %s26, %s38
      %s41 = sor.u32 %s39, %s40
      %p42 = scmp.eq.s32.totalorder %s41, 0
      %s44 = sadd.s32 %s43, 1
      %s45 = scalar_select %p42, %s43, %s44
      %p48 = pneg %p42
      %p49 = scmp.eq.s32.totalorder %s19, 1
      %p50 = por %p48, %p49
      %p51 = scmp.ne.s32.totalorder %s43, %s46
      %p52 = scmp.eq.s32.totalorder %s19, 0
      %p53 = por %p51, %p52
      %p54 = scmp.ne.s32.totalorder %s43, %s46
      %p55 = scmp.eq.s32.totalorder %s24, 1
      %p56 = por %p54, %p55
      %p57 = scmp.ne.s32.totalorder %s46, %s47
      %p58 = scmp.eq.s32.totalorder %s24, 0
      %p59 = por %p57, %p58
      %p60 = scmp.ne.s32.totalorder %s46, %s47
      %p61 = scmp.eq.s32.totalorder %s25, 1
      %p62 = por %p60, %p61
      %p64 = scmp.ne.s32.totalorder %s47, %s63
      %p65 = scmp.eq.s32.totalorder %s25, 0
      %p66 = por %p64, %p65
      %s67 = ssub.s32 %s27, %s34
      %s68 = ssub.s32 %s26, %s38
      %s69 = sor.u32 %s67, %s68
      %p70 = scmp.eq.s32.totalorder %s69, 0
      %s72 = sadd.s32 %s71, 1
      %s73 = scalar_select %p70, %s71, %s72
      %p76 = pneg %p70
      %p77 = scmp.eq.s32.totalorder %s19, 1
      %p78 = por %p76, %p77
      %p79 = scmp.ne.s32.totalorder %s71, %s74
      %p80 = scmp.eq.s32.totalorder %s19, 0
      %p81 = por %p79, %p80
      %p82 = scmp.ne.s32.totalorder %s71, %s74
      %p83 = scmp.eq.s32.totalorder %s24, 1
      %p84 = por %p82, %p83
      %p85 = scmp.ne.s32.totalorder %s74, %s75
      %p86 = scmp.eq.s32.totalorder %s24, 0
      %p87 = por %p85, %p86
      %p88 = scmp.ne.s32.totalorder %s74, %s75
      %p89 = scmp.eq.s32.totalorder %s25, 1
      %p90 = por %p88, %p89
      %p92 = scmp.ne.s32.totalorder %s75, %s91
      %p93 = scmp.eq.s32.totalorder %s25, 0
      %p94 = por %p92, %p93
      %s95 = ssub.s32 %s26, %s38
      %p96 = scmp.eq.s32.totalorder %s95, 0
      %s98 = sadd.s32 %s97, 1
      %s99 = scalar_select %p96, %s97, %s98
      %p102 = pneg %p96
      %p103 = scmp.eq.s32.totalorder %s19, 1
      %p104 = por %p102, %p103
      %p105 = scmp.ne.s32.totalorder %s97, %s100
      %p106 = scmp.eq.s32.totalorder %s19, 0
      %p107 = por %p105, %p106
      %p108 = scmp.ne.s32.totalorder %s97, %s100
      %p109 = scmp.eq.s32.totalorder %s24, 1
      %p110 = por %p108, %p109
      %p111 = scmp.ne.s32.totalorder %s100, %s101
      %p112 = scmp.eq.s32.totalorder %s24, 0
      %p113 = por %p111, %p112
      %p114 = scmp.ne.s32.totalorder %s100, %s101
      %p115 = scmp.eq.s32.totalorder %s25, 1
      %p116 = por %p114, %p115
      %p118 = scmp.ne.s32.totalorder %s101, %s117
      %p119 = scmp.eq.s32.totalorder %s25, 0
      %p120 = por %p118, %p119
      %s121 = ssub.s32 %s26, %s38
      %p122 = scmp.eq.s32.totalorder %s121, 0
      %s124 = sadd.s32 %s123, 1
      %s125 = scalar_select %p122, %s123, %s124
      %p128 = pneg %p122
      %p129 = scmp.eq.s32.totalorder %s19, 1
      %p130 = por %p128, %p129
      %p131 = scmp.ne.s32.totalorder %s123, %s126
      %p132 = scmp.eq.s32.totalorder %s19, 0
      %p133 = por %p131, %p132
      %p134 = scmp.ne.s32.totalorder %s123, %s126
      %p135 = scmp.eq.s32.totalorder %s24, 1
      %p136 = por %p134, %p135
      %p137 = scmp.ne.s32.totalorder %s126, %s127
      %p138 = scmp.eq.s32.totalorder %s24, 0
      %p139 = por %p137, %p138
      %p140 = scmp.ne.s32.totalorder %s126, %s127
      %p141 = scmp.eq.s32.totalorder %s25, 1
      %p142 = por %p140, %p141
      %p144 = scmp.ne.s32.totalorder %s127, %s143
      %p145 = scmp.eq.s32.totalorder %s25, 0
      %p146 = por %p144, %p145
      %p147 = scmp.le.s32.totalorder 1, %s19
      %p148 = scmp.lt.s32.totalorder %s19, 3
      %p149 = pnand %p147, %p148
      %p150 = pneg %p149
      // Predicated region
      $region9: #{tpu_custom_call.1} parent=5 // pred_check
        _
      $region10: #{tpu_custom_call.1} parent=5 // pred_check_branch
        %152 = sbr.rel (%p149) target = $region12
      $region11: #{tpu_custom_call.1} parent=5 // pred_region
        %s153 = ssub.s32 %s19, 1
      $region12: #{tpu_custom_call.1} parent=5 // pred_fallthru
        _
      %p154 = scmp.lt.s32.totalorder %s19, 2
      // Predicated region
      $region13: #{tpu_custom_call.1} parent=5 // pred_check
        %p155 = pneg %p154
      $region14: #{tpu_custom_call.1} parent=5 // pred_check_branch
        %157 = sbr.rel (%p155) target = $region16
      $region15: #{tpu_custom_call.1} parent=5 // pred_region
        // Predicated region
        $region17: #{tpu_custom_call.1} parent=15 // pred_check
          %p158 = pneg %p53
        $region18: #{tpu_custom_call.1} parent=15 // pred_check_branch
          %160 = sbr.rel (%p158) target = $region20
        $region19: #{tpu_custom_call.1} parent=15 // pred_region
          %s161 = sand.u32 %s43, 1
          %s162 = scalar_lea.sflag [#allocation5], %s161
          %s163 = sand.u32 %s43, 1
          %s164 = smul.addr %s163, 64
          %s165 = scalar_lea.vmem [#allocation4], %s164
          %s166 = smul.u32 8, %s27
          %s168 = ssub.s32 1024, 1024
          %169 = vsyncadd %s162, %s168
          %s170 = smul.addr %s166, 2
          %s171 = sadd.s32 %s26, %s170
          %s172 = smul.addr %s171, 128
          %s173 = scalar_lea.hbm %s0, %s172
          %s174 = sshll.u32 %s165, 4
          %s175 = int_to_ptr.vmem [resolvable:$true] %s174
          %180 = dma.hbm_to_vmem [thread:$0]  %s173, 1024, %s175, %s162, 256, 128, 8
        $region20: #{tpu_custom_call.1} parent=15 // pred_fallthru
          _
      $region16: #{tpu_custom_call.1} parent=5 // pred_fallthru
        _
      %p181 = scmp.le.s32.totalorder 1, %s19
      %p182 = scmp.lt.s32.totalorder %s19, 3
      %p183 = pnand %p181, %p182
      %p184 = pneg %p183
      // Predicated region
      $region21: #{tpu_custom_call.1} parent=5 // pred_check
        _
      $region22: #{tpu_custom_call.1} parent=5 // pred_check_branch
        %186 = sbr.rel (%p183) target = $region24
      $region23: #{tpu_custom_call.1} parent=5 // pred_region
        %s187 = ssub.s32 %s19, 1
        %s188 = sand.u32 %s46, 1
        %s189 = scalar_lea.sflag [#allocation5], %s188
        %s190 = sand.u32 %s46, 1
        %s191 = smul.addr %s190, 64
        %s192 = scalar_lea.vmem [#allocation4], %s191
        // Predicated region
        $region25: #{tpu_custom_call.1} parent=23 // pred_check
          %p193 = pneg %p59
        $region26: #{tpu_custom_call.1} parent=23 // pred_check_branch
          %195 = sbr.rel (%p193) target = $region28
        $region27: #{tpu_custom_call.1} parent=23 // pred_region
          %196 = dma.done %s189, 1024
        $region28: #{tpu_custom_call.1} parent=23 // pred_fallthru
          _
        %s197 = sand.u32 %s46, 1
        %s198 = scalar_lea.sflag [#allocation5], %s197
        %s199 = sand.u32 %s46, 1
        %s200 = smul.addr %s199, 64
        %s201 = scalar_lea.vmem [#allocation4], %s200
        %p202 = pneg %p59
        %p203 = pneg %p56
        %p204 = pneg %p87
        %p205 = pneg %p84
        %s206 = sand.u32 %s74, 1
        %s207 = scalar_lea.sflag [#allocation6], %s206
        %s208 = sand.u32 %s74, 1
        %s209 = smul.addr %s208, 64
        %s210 = scalar_lea.vmem [#allocation7], %s209
        %p211 = pneg %p113
        %p212 = pneg %p110
        %s213 = sand.u32 %s24, 1
        %s214 = scalar_lea.sflag [#allocation9], %s213
        %s215 = sand.u32 %s100, 1
        %s216 = smul.addr %s215, 8
        %s217 = scalar_lea.vmem [#allocation8], %s216
        %p218 = pneg %p139
        %p219 = pneg %p136
        %s220 = sand.u32 %s24, 1
        %s221 = scalar_lea.sflag [#allocation9], %s220
        %s222 = sand.u32 %s126, 1
        %s223 = smul.addr %s222, 8
        %s224 = scalar_lea.vmem [#allocation10], %s223
        %s225 = smul.u32 8, %s29
        %s226 = smul.u32 8, %s29
        %p227 = scmp.eq.s32.totalorder %s29, 0
        // Predicated region
        $region29: #{tpu_custom_call.1} parent=23 // pred_check
          %p228 = pneg %p227
        $region30: #{tpu_custom_call.1} parent=23 // pred_check_branch
          %230 = sbr.rel (%p228) target = $region32
        $region31: #{tpu_custom_call.1} parent=23 // pred_region
          %231 = vst [vmem:[#allocation2] sm:$0xff] 0.0
          %232 = vst [vmem:[#allocation3] sm:$0xff] 0.0
        $region32: #{tpu_custom_call.1} parent=23 // pred_fallthru
          _
        %v233 = vld [vmem:[#allocation2] sm:$0xff]
        %v234 = vld [vmem:[#allocation3] sm:$0xff]
        %v235 = vld [vmem:[%s192] sm:$0xff]
        %v236 = vadd.f32 %v233, %v235
        %vm237 = vcmp.ge.f32.partialorder %v236, 1.0
        %v238 = vmul.f32 %v234, 0.5
        %v239 = vsel %vm237, 1.0, 0.0
        %v240 = vadd.f32 %v238, %v239
        %v241 = vmul.f32 %v236, 0.0
        %v242 = vsel %vm237, %v241, %v236
        %243 = vst [vmem:[%s210] sm:$0xff] %v240
        %s244 = scalar_lea.vmem %s192, 8 [#allocation4]
        %v245 = vld [vmem:[%s244] sm:$0xff]
        %v246 = vadd.f32 %v242, %v245
        %vm247 = vcmp.ge.f32.partialorder %v246, 1.0
        %v248 = vmul.f32 %v240, 0.5
        %v249 = vsel %vm247, 1.0, 0.0
        %v250 = vadd.f32 %v248, %v249
        %v251 = vmul.f32 %v246, 0.0
        %v252 = vsel %vm247, %v251, %v246
        %s253 = scalar_lea.vmem %s210, 8 [#allocation7]
        %254 = vst [vmem:[%s253] sm:$0xff] %v250
        %s255 = scalar_lea.vmem %s192, 16 [#allocation4]
        %v256 = vld [vmem:[%s255] sm:$0xff]
        %v257 = vadd.f32 %v252, %v256
        %vm258 = vcmp.ge.f32.partialorder %v257, 1.0
        %v259 = vmul.f32 %v250, 0.5
        %v260 = vsel %vm258, 1.0, 0.0
        %v261 = vadd.f32 %v259, %v260
        %v262 = vmul.f32 %v257, 0.0
        %v263 = vsel %vm258, %v262, %v257
        %s264 = scalar_lea.vmem %s210, 16 [#allocation7]
        %265 = vst [vmem:[%s264] sm:$0xff] %v261
        %s266 = scalar_lea.vmem %s192, 24 [#allocation4]
        %v267 = vld [vmem:[%s266] sm:$0xff]
        %v268 = vadd.f32 %v263, %v267
        %vm269 = vcmp.ge.f32.partialorder %v268, 1.0
        %v270 = vmul.f32 %v261, 0.5
        %v271 = vsel %vm269, 1.0, 0.0
        %v272 = vadd.f32 %v270, %v271
        %v273 = vmul.f32 %v268, 0.0
        %v274 = vsel %vm269, %v273, %v268
        %s275 = scalar_lea.vmem %s210, 24 [#allocation7]
        %276 = vst [vmem:[%s275] sm:$0xff] %v272
        %s277 = scalar_lea.vmem %s192, 32 [#allocation4]
        %v278 = vld [vmem:[%s277] sm:$0xff]
        %v279 = vadd.f32 %v274, %v278
        %vm280 = vcmp.ge.f32.partialorder %v279, 1.0
        %v281 = vmul.f32 %v272, 0.5
        %v282 = vsel %vm280, 1.0, 0.0
        %v283 = vadd.f32 %v281, %v282
        %v284 = vmul.f32 %v279, 0.0
        %v285 = vsel %vm280, %v284, %v279
        %s286 = scalar_lea.vmem %s210, 32 [#allocation7]
        %287 = vst [vmem:[%s286] sm:$0xff] %v283
        %s288 = scalar_lea.vmem %s192, 40 [#allocation4]
        %v289 = vld [vmem:[%s288] sm:$0xff]
        %v290 = vadd.f32 %v285, %v289
        %vm291 = vcmp.ge.f32.partialorder %v290, 1.0
        %v292 = vmul.f32 %v283, 0.5
        %v293 = vsel %vm291, 1.0, 0.0
        %v294 = vadd.f32 %v292, %v293
        %v295 = vmul.f32 %v290, 0.0
        %v296 = vsel %vm291, %v295, %v290
        %s297 = scalar_lea.vmem %s210, 40 [#allocation7]
        %298 = vst [vmem:[%s297] sm:$0xff] %v294
        %s299 = scalar_lea.vmem %s192, 48 [#allocation4]
        %v300 = vld [vmem:[%s299] sm:$0xff]
        %v301 = vadd.f32 %v296, %v300
        %vm302 = vcmp.ge.f32.partialorder %v301, 1.0
        %v303 = vmul.f32 %v294, 0.5
        %v304 = vsel %vm302, 1.0, 0.0
        %v305 = vadd.f32 %v303, %v304
        %v306 = vmul.f32 %v301, 0.0
        %v307 = vsel %vm302, %v306, %v301
        %s308 = scalar_lea.vmem %s210, 48 [#allocation7]
        %309 = vst [vmem:[%s308] sm:$0xff] %v305
        %s310 = scalar_lea.vmem %s192, 56 [#allocation4]
        %v311 = vld [vmem:[%s310] sm:$0xff]
        %v312 = vadd.f32 %v307, %v311
        %vm313 = vcmp.ge.f32.partialorder %v312, 1.0
        %v314 = vmul.f32 %v305, 0.5
        %v315 = vsel %vm313, 1.0, 0.0
        %v316 = vadd.f32 %v314, %v315
        %v317 = vmul.f32 %v312, 0.0
        %v318 = vsel %vm313, %v317, %v312
        %s319 = scalar_lea.vmem %s210, 56 [#allocation7]
        %320 = vst [vmem:[%s319] sm:$0xff] %v316
        %321 = vst [vmem:[#allocation2] sm:$0xff] %v318
        %322 = vst [vmem:[#allocation3] sm:$0xff] %v316
        // Predicated region
        $region33: #{tpu_custom_call.1} parent=23 // pred_check
          %p323 = pneg %p227
        $region34: #{tpu_custom_call.1} parent=23 // pred_check_branch
          %325 = sbr.rel (%p323) target = $region36
        $region35: #{tpu_custom_call.1} parent=23 // pred_region
          %326 = vst [vmem:[%s217] sm:$0xff] %v318
          %327 = vst [vmem:[%s224] sm:$0xff] %v316
        $region36: #{tpu_custom_call.1} parent=23 // pred_fallthru
          _
        %s328 = sand.u32 %s74, 1
        %s329 = scalar_lea.sflag [#allocation6], %s328
        %s330 = sand.u32 %s74, 1
        %s331 = smul.addr %s330, 64
        %s332 = scalar_lea.vmem [#allocation7], %s331
        %s333 = sand.u32 %s24, 1
        %s334 = scalar_lea.sflag [#allocation9], %s333
        %s335 = sand.u32 %s100, 1
        %s336 = smul.addr %s335, 8
        %s337 = scalar_lea.vmem [#allocation8], %s336
        %s338 = sand.u32 %s24, 1
        %s339 = scalar_lea.sflag [#allocation9], %s338
        %s340 = sand.u32 %s126, 1
        %s341 = smul.addr %s340, 8
        %s342 = scalar_lea.vmem [#allocation10], %s341
        // Predicated region
        $region37: #{tpu_custom_call.1} parent=23 // pred_check
          %p343 = pneg %p84
        $region38: #{tpu_custom_call.1} parent=23 // pred_check_branch
          %345 = sbr.rel (%p343) target = $region40
        $region39: #{tpu_custom_call.1} parent=23 // pred_region
          %s346 = smul.u32 8, %s29
          %s348 = ssub.s32 1024, 1024
          %349 = vsyncadd %s329, %s348
          %s350 = smul.addr %s346, 2
          %s351 = sadd.s32 %s28, %s350
          %s352 = smul.addr %s351, 128
          %s353 = scalar_lea.hbm %s1, %s352
          %s354 = sshll.u32 %s332, 4
          %s355 = int_to_ptr.vmem [resolvable:$true] %s354
          %360 = dma.vmem_to_hbm [thread:$0]  %s355, 1024, %s353, %s329, 128, 256, 8
        $region40: #{tpu_custom_call.1} parent=23 // pred_fallthru
          _
        // Predicated region
        $region41: #{tpu_custom_call.1} parent=23 // pred_check
          %p361 = pneg %p110
        $region42: #{tpu_custom_call.1} parent=23 // pred_check_branch
          %363 = sbr.rel (%p361) target = $region44
        $region43: #{tpu_custom_call.1} parent=23 // pred_region
          %s365 = ssub.s32 128, 128
          %366 = vsyncadd %s334, %s365
          %s367 = smul.addr %s28, 128
          %s368 = scalar_lea.hbm %s2, %s367
          %s370 = sshll.u32 %s337, 4
          %s371 = int_to_ptr.vmem [resolvable:$true] %s370
          %373 = dma.vmem_to_hbm [thread:$0]  %s371, 128, %s368, %s334
        $region44: #{tpu_custom_call.1} parent=23 // pred_fallthru
          _
        // Predicated region
        $region45: #{tpu_custom_call.1} parent=23 // pred_check
          %p374 = pneg %p136
        $region46: #{tpu_custom_call.1} parent=23 // pred_check_branch
          %376 = sbr.rel (%p374) target = $region48
        $region47: #{tpu_custom_call.1} parent=23 // pred_region
          %s378 = ssub.s32 128, 128
          %379 = vsyncadd %s339, %s378
          %s380 = smul.addr %s28, 128
          %s381 = scalar_lea.hbm %s3, %s380
          %s383 = sshll.u32 %s342, 4
          %s384 = int_to_ptr.vmem [resolvable:$true] %s383
          %386 = dma.vmem_to_hbm [thread:$0]  %s384, 128, %s381, %s339
        $region48: #{tpu_custom_call.1} parent=23 // pred_fallthru
          _
      $region24: #{tpu_custom_call.1} parent=5 // pred_fallthru
        _
      %p387 = scmp.le.s32.totalorder 2, %s19
      // Predicated region
      $region49: #{tpu_custom_call.1} parent=5 // pred_check
        %p388 = pneg %p387
      $region50: #{tpu_custom_call.1} parent=5 // pred_check_branch
        %390 = sbr.rel (%p388) target = $region52
      $region51: #{tpu_custom_call.1} parent=5 // pred_region
        %s391 = ssub.s32 %s19, 2
        // Predicated region
        $region53: #{tpu_custom_call.1} parent=51 // pred_check
          %p392 = pneg %p90
        $region54: #{tpu_custom_call.1} parent=51 // pred_check_branch
          %394 = sbr.rel (%p392) target = $region56
        $region55: #{tpu_custom_call.1} parent=51 // pred_region
          %s395 = sand.u32 %s75, 1
          %s396 = scalar_lea.sflag [#allocation6], %s395
          %s397 = sand.u32 %s75, 1
          %s398 = smul.addr %s397, 64
          %s399 = scalar_lea.vmem [#allocation7], %s398
          %400 = dma.done %s396, 1024
        $region56: #{tpu_custom_call.1} parent=51 // pred_fallthru
          _
        // Predicated region
        $region57: #{tpu_custom_call.1} parent=51 // pred_check
          %p401 = pneg %p116
        $region58: #{tpu_custom_call.1} parent=51 // pred_check_branch
          %403 = sbr.rel (%p401) target = $region60
        $region59: #{tpu_custom_call.1} parent=51 // pred_region
          %s404 = sand.u32 %s25, 1
          %s405 = scalar_lea.sflag [#allocation9], %s404
          %s406 = sand.u32 %s101, 1
          %s407 = smul.addr %s406, 8
          %s408 = scalar_lea.vmem [#allocation8], %s407
          %409 = dma.done %s405, 128
        $region60: #{tpu_custom_call.1} parent=51 // pred_fallthru
          _
        // Predicated region
        $region61: #{tpu_custom_call.1} parent=51 // pred_check
          %p410 = pneg %p142
        $region62: #{tpu_custom_call.1} parent=51 // pred_check_branch
          %412 = sbr.rel (%p410) target = $region64
        $region63: #{tpu_custom_call.1} parent=51 // pred_region
          %s413 = sand.u32 %s25, 1
          %s414 = scalar_lea.sflag [#allocation9], %s413
          %s415 = sand.u32 %s127, 1
          %s416 = smul.addr %s415, 8
          %s417 = scalar_lea.vmem [#allocation10], %s416
          %418 = dma.done %s414, 128
        $region64: #{tpu_custom_call.1} parent=51 // pred_fallthru
          _
      $region52: #{tpu_custom_call.1} parent=5 // pred_fallthru
        _
    $region6: #{tpu_custom_call.1} parent=1 // loop_footer
      %s23 = sadd.s32 1, %s19
    $region7: #{tpu_custom_call.1} parent=1 // loop_footer_branch
      %18 = sbr.rel target = $region3
    $region8: #{tpu_custom_call.1} parent=1 // loop_exit
      _
    %419 = vsyncpa [#allocation5], 1
    %s420 = scalar_lea.sflag [#allocation5], 1
    %421 = vsyncpa %s420, 1
    %422 = vsyncpa [#allocation6], 1
    %s423 = scalar_lea.sflag [#allocation6], 1
    %424 = vsyncpa %s423, 1
    %425 = vsyncpa [#allocation9], 1
    %s426 = scalar_lea.sflag [#allocation9], 1
    %427 = vsyncpa %s426, 1

</llo_original>
